<compile_context>
chip_gen: v7x
topology: tpu7x:2x2x1
jax: 0.10.0
libtpu: 0.0.40
codegen_flags: <defaults>
</compile_context>

<pallas_src>
import functools
import math

import jax
import jax.numpy as jnp
from jax import lax
from jax.experimental import pallas as pl
from jax.experimental.pallas import tpu as pltpu

_LANES = 128
# 32 MiB scoped VMEM is <= physical on every generation (v5e/v6e: 128 MiB,
# v7x: 64 MiB per TensorCore) and comfortably holds the tiles chosen below.
_VMEM_LIMIT = 32 * 1024 * 1024


def _round_up(x, m):
    return ((x + m - 1) // m) * m


# ---------------------------------------------------------------------------
# Kernel 1: row-wise L2 normalize (== F.normalize(w, dim=1))
# ---------------------------------------------------------------------------
def _l2_norm_kernel(w_ref, o_ref):
    w = w_ref[...]
    sumsq = jnp.sum(w * w, axis=-1, keepdims=True)
    # rsqrt goes to the EUP slot; clamp at 1e-24 == (1e-12)^2 preserves
    # F.normalize's eps-on-the-norm semantics.
    inv = lax.rsqrt(jnp.maximum(sumsq, 1e-24))
    o_ref[...] = w * inv


def _l2_norm_packed_kernel(grp_ref, w_ref, o_ref):
    # Lane-dense path for d < 128: each kernel row packs g = 128//d original
    # rows.  Per-group sums of squares are computed on the (otherwise idle) MXU
    # with a block-diagonal 0/1 matrix (resident input, fetched once);
    # afterwards every lane holds the squared norm of its own original row.
    # NOTE: precision=HIGHEST is load-bearing for the 1e-5 tolerance check.
    w = w_ref[...]
    sumsq = jnp.dot(w * w, grp_ref[...], preferred_element_type=jnp.float32,
                    precision=lax.Precision.HIGHEST)
    inv = lax.rsqrt(jnp.maximum(sumsq, 1e-24))
    o_ref[...] = w * inv


def _pick_row_tile(n, d, target_bytes=6 << 20):
    # ~6 MiB per input tile -> ~24 MiB with double-buffered in+out, inside the
    # 32 MiB scoped budget on all generations.  At 3.2 TB/s (v7x) a 6 MiB tile
    # amortizes the ~0.35 us per-grid-step overhead (~85-90% of roofline).
    rt = (target_bytes // (d * 4)) // 8 * 8
    rt = max(8, rt)
    if rt >= n:
        return n  # single full-array block (always a legal block shape)
    return rt


def l2_normalize_rows(w):
    """Row-wise L2 normalization of an [N, D] table (== F.normalize(w, dim=1))."""
    n, d = w.shape

    if d < _LANES and _LANES % d == 0:
        # Lane-dense packed path.  Pad N so it is always taken (padded zero rows
        # normalize to zero and are sliced off afterwards).
        g = _LANES // d
        n_pad = _round_up(n, g)
        wp = w if n_pad == n else jnp.concatenate(
            [w, jnp.zeros((n_pad - n, d), w.dtype)], axis=0)
        packed = wp.reshape(n_pad // g, _LANES)          # lane-dense [N_pad/g, 128]

        lane = lax.broadcasted_iota(jnp.int32, (_LANES, _LANES), 0)
        col = lax.broadcasted_iota(jnp.int32, (_LANES, _LANES), 1)
        grp = ((lane // d) == (col // d)).astype(jnp.float32)   # built once, host side

        npk = packed.shape[0]
        rt = _pick_row_tile(npk, _LANES)
        out = pl.pallas_call(
            _l2_norm_packed_kernel,
            out_shape=jax.ShapeDtypeStruct(packed.shape, w.dtype),
            grid=(pl.cdiv(npk, rt),),
            in_specs=[pl.BlockSpec((_LANES, _LANES), lambda i: (0, 0)),  # resident mask
                      pl.BlockSpec((rt, _LANES), lambda i: (i, 0))],
            out_specs=pl.BlockSpec((rt, _LANES), lambda i: (i, 0)),
            compiler_params=pltpu.CompilerParams(
                dimension_semantics=("parallel",),   # shards across TCs on v7x
                vmem_limit_bytes=_VMEM_LIMIT),
        )(grp, packed)
        return out.reshape(n_pad, d)[:n]

    # D >= 128 (or 128 % D != 0): already lane-dense enough; plain row tiles.
    rt = _pick_row_tile(n, d)
    return pl.pallas_call(
        _l2_norm_kernel,
        out_shape=jax.ShapeDtypeStruct((n, d), w.dtype),
        grid=(pl.cdiv(n, rt),),                         # partial tail tile masked by Pallas
        in_specs=[pl.BlockSpec((rt, d), lambda i: (i, 0))],
        out_specs=pl.BlockSpec((rt, d), lambda i: (i, 0)),
        compiler_params=pltpu.CompilerParams(
            dimension_semantics=("parallel",),
            vmem_limit_bytes=_VMEM_LIMIT),
    )(w)


# ---------------------------------------------------------------------------
# Kernel 2: streaming TransE hinge-loss (gathered rows fed as dense streams)
# ---------------------------------------------------------------------------
def _transe_hinge_kernel(ph_ref, pt_ref, pr_ref, nh_ref, nt_ref, nr_ref,
                         o_ref, *, tile_b, batch, margin, norm_p):
    i = pl.program_id(0)

    pos_d = ph_ref[...] + pr_ref[...] - pt_ref[...]
    neg_d = nh_ref[...] + nr_ref[...] - nt_ref[...]
    if norm_p == 1:
        pos_s = jnp.sum(jnp.abs(pos_d), axis=-1, keepdims=True)
        neg_s = jnp.sum(jnp.abs(neg_d), axis=-1, keepdims=True)
    else:  # p == 2
        pos_s = jnp.sqrt(jnp.sum(pos_d * pos_d, axis=-1, keepdims=True))
        neg_s = jnp.sqrt(jnp.sum(neg_d * neg_d, axis=-1, keepdims=True))
    hinge = jnp.maximum(margin + pos_s - neg_s, 0.0)            # (tile_b, 1)

    row = lax.broadcasted_iota(jnp.int32, hinge.shape, 0)
    hinge = jnp.where(i * tile_b + row < batch, hinge, 0.0)      # mask padded tail

    # Per-tile partial sum: each grid step owns its own output block, so the
    # grid axis is truly "parallel" (v7x megacore splits the batch tiles).
    o_ref[...] = jnp.sum(hinge, axis=0, keepdims=True)


def transe_loss(ent, rel, pos_x, neg_x, *, margin, norm_p):
    """mean(max(margin + ||h+r-t||_p(pos) - ||h+r-t||_p(neg), 0))."""
    b = pos_x.shape[0]
    _, d = ent.shape
    assert rel.shape[1] == d, "entity/relation embedding widths must match"

    # Embedding lookups via XLA gather in the wrapper (per review: dense (B, D)
    # streams through a BlockSpec-pipelined kernel beat latency-bound per-row
    # DMA gathers on every generation).
    pos_x = pos_x.astype(jnp.int32)
    neg_x = neg_x.astype(jnp.int32)
    ph = jnp.take(ent, pos_x[:, 0], axis=0)
    pt = jnp.take(ent, pos_x[:, 1], axis=0)
    pr = jnp.take(rel, pos_x[:, 2], axis=0)
    nh = jnp.take(ent, neg_x[:, 0], axis=0)
    nt = jnp.take(ent, neg_x[:, 1], axis=0)
    nr = jnp.take(rel, neg_x[:, 2], axis=0)

    # ~12 MiB double-buffered input budget across the 6 streams; 128-256 rows
    # per tile is enough to amortize the ~0.35 us per-grid-step overhead.
    tile_b = (12 << 20) // (6 * 2 * d * 4)
    tile_b = max(8, min(256, (tile_b // 8) * 8))
    tile_b = min(tile_b, _round_up(b, 8))
    b_pad = _round_up(b, tile_b)
    nb = b_pad // tile_b

    def pad_rows(x):
        if b_pad == b:
            return x
        return jnp.concatenate([x, jnp.zeros((b_pad - b, d), x.dtype)], axis=0)

    streams = [pad_rows(x) for x in (ph, pt, pr, nh, nt, nr)]

    kern = functools.partial(_transe_hinge_kernel, tile_b=tile_b, batch=b,
                             margin=float(margin), norm_p=int(norm_p))
    partials = pl.pallas_call(
        kern,
        out_shape=jax.ShapeDtypeStruct((nb, 1), jnp.float32),
        grid=(nb,),
        in_specs=[pl.BlockSpec((tile_b, d), lambda i: (i, 0)) for _ in range(6)],
        out_specs=pl.BlockSpec((1, 1), lambda i: (i, 0)),
        compiler_params=pltpu.CompilerParams(
            dimension_semantics=("parallel",),   # batch tiles split across TCs on v7x
            vmem_limit_bytes=_VMEM_LIMIT),
    )(*streams)
    return jnp.sum(partials) / jnp.float32(b)   # mean over the true batch size


# ---------------------------------------------------------------------------
# TransE module (parameters initialized deterministically in-script)
# ---------------------------------------------------------------------------
class TransE:
    def __init__(self, key, n_ent, n_rel, dim, margin, norm):
        self.depth = dim
        self.margin = float(margin)
        self.norm = int(norm)
        bound = 6.0 / math.sqrt(dim)
        k_ent, k_rel = jax.random.split(key)
        self.ent_embed = jax.random.uniform(
            k_ent, (n_ent, dim), jnp.float32, minval=-bound, maxval=bound)
        rel = jax.random.uniform(
            k_rel, (n_rel, dim), jnp.float32, minval=-bound, maxval=bound)
        # rel table is L2-normalized once at init (as in PyTorch initialize()).
        self.rel_embed = l2_normalize_rows(rel)

    def forward(self, pos_x, neg_x):
        # constraint(): re-normalize the entity table every forward.
        ent = l2_normalize_rows(self.ent_embed)
        self.ent_embed = ent
        return transe_loss(ent, self.rel_embed, pos_x, neg_x,
                           margin=self.margin, norm_p=self.norm)


# ---------------------------------------------------------------------------
def _reference_loss(ent, rel, pos_x, neg_x, margin, norm_p):
    def normalize(w):
        return w / jnp.maximum(jnp.linalg.norm(w, axis=1, keepdims=True), 1e-12)

    ent = normalize(ent)

    def score(x):
        h = ent[x[:, 0]]
        t = ent[x[:, 1]]
        r = rel[x[:, 2]]
        dlt = h + r - t
        if norm_p == 1:
            return jnp.sum(jnp.abs(dlt), axis=-1)
        return jnp.sqrt(jnp.sum(dlt * dlt, axis=-1))

    return jnp.mean(jnp.maximum(margin + score(pos_x) - score(neg_x), 0.0))


if __name__ == "__main__":
    n_ent, n_rel, dim = 64, 16, 32
    batch = 10                       # not a multiple of the batch tile -> exercises masking
    margin, norm_p = 1.0, 2

    key = jax.random.PRNGKey(0)
    k_model, k_pos, k_neg = jax.random.split(key, 3)

    model = TransE(k_model, n_ent, n_rel, dim, margin, norm_p)

    kp1, kp2, kp3 = jax.random.split(k_pos, 3)
    kn1, kn2, kn3 = jax.random.split(k_neg, 3)
    pos_x = jnp.stack([
        jax.random.randint(kp1, (batch,), 0, n_ent),
        jax.random.randint(kp2, (batch,), 0, n_ent),
        jax.random.randint(kp3, (batch,), 0, n_rel),
    ], axis=1)
    neg_x = jnp.stack([
        jax.random.randint(kn1, (batch,), 0, n_ent),
        jax.random.randint(kn2, (batch,), 0, n_ent),
        jax.random.randint(kn3, (batch,), 0, n_rel),
    ], axis=1)

    ent0 = model.ent_embed           # pre-constraint table, for reference checks
    loss = model.forward(pos_x, neg_x)
    loss = jax.block_until_ready(loss)

    # Check the lane-packed / MXU normalize kernel against F.normalize semantics.
    ref_ent = ent0 / jnp.maximum(jnp.linalg.norm(ent0, axis=1, keepdims=True), 1e-12)
    assert jnp.allclose(model.ent_embed, ref_ent, atol=1e-5, rtol=1e-5)

    # Check the streaming hinge-loss kernel (p = 2 and p = 1).
    ref2 = _reference_loss(ent0, model.rel_embed, pos_x, neg_x, margin, 2)
    assert jnp.allclose(loss, ref2, atol=1e-5, rtol=1e-5), (loss, ref2)

    loss1 = transe_loss(model.ent_embed, model.rel_embed, pos_x, neg_x,
                        margin=margin, norm_p=1)
    loss1 = jax.block_until_ready(loss1)
    ref1 = _reference_loss(ent0, model.rel_embed, pos_x, neg_x, margin, 1)
    assert jnp.allclose(loss1, ref1, atol=1e-5, rtol=1e-5), (loss1, ref1)

    print("KERNEL_OK")
</pallas_src>

<mosaic_0001>
module attributes {stable_mosaic.version = 11 : i64} {
  func.func @_l2_norm_packed_kernel(%arg0: i32, %arg1: memref<128x128xf32, #tpu.memory_space<vmem>>, %arg2: memref<4x128xf32, #tpu.memory_space<vmem>>, %arg3: memref<4x128xf32, #tpu.memory_space<vmem>>) attributes {dimension_semantics = [#tpu.dimension_semantics<parallel>], iteration_bounds = array<i64: 1>, scalar_prefetch = 0 : i64, scratch_operands = 0 : i64, tpu.core_type = #tpu.core_type<tc>, window_params = [{pipeline_mode = #tpu.pipeline_mode<synchronous>, transform_indices = @transform_0, window_bounds = array<i64: 128, 128>}, {transform_indices = @transform_1, window_bounds = array<i64: 4, 128>}, {transform_indices = @transform_2, window_bounds = array<i64: 4, 128>}]} {
    %c0 = arith.constant 0 : index
    %c0_0 = arith.constant 0 : index
    %0 = vector.load %arg2[%c0, %c0_0] : memref<4x128xf32, #tpu.memory_space<vmem>>, vector<4x128xf32>
    %1 = arith.mulf %0, %0 : vector<4x128xf32>
    %c0_1 = arith.constant 0 : index
    %c0_2 = arith.constant 0 : index
    %2 = vector.load %arg1[%c0_1, %c0_2] : memref<128x128xf32, #tpu.memory_space<vmem>>, vector<128x128xf32>
    %cst = arith.constant dense<0.000000e+00> : vector<4x128xf32>
    %3 = tpu.matmul %1, %2, %cst {dimension_numbers = #tpu.dot_dimension_numbers<[1], [0], [0], [1], [0, 0, 1, 1], [], []>, precision = #tpu.contract_precision<fp32>} : vector<4x128xf32>, vector<128x128xf32>, vector<4x128xf32> -> vector<4x128xf32>
    %cst_3 = arith.constant 1.000000e-24 : f32
    %4 = vector.broadcast %cst_3 : f32 to vector<4x128xf32>
    %5 = arith.maximumf %3, %4 : vector<4x128xf32>
    %6 = math.rsqrt %5 : vector<4x128xf32>
    %7 = arith.mulf %0, %6 : vector<4x128xf32>
    %c0_4 = arith.constant 0 : index
    %c0_5 = arith.constant 0 : index
    %8 = vector.load %arg3[%c0_4, %c0_5] : memref<4x128xf32, #tpu.memory_space<vmem>>, vector<4x128xf32>
    tpu.vector_store %arg3[%c0_4, %c0_5], %7 {strides = array<i32>} : memref<4x128xf32, #tpu.memory_space<vmem>>, vector<4x128xf32>,
    return
  }
  func.func @transform_0(%arg0: i32) -> (i32, i32) {
    %c0_i32 = arith.constant 0 : i32
    %c0_i32_0 = arith.constant 0 : i32
    %c0_i32_1 = arith.constant 0 : i32
    return %c0_i32, %c0_i32_0 : i32, i32
  }
  func.func @transform_1(%arg0: i32) -> (i32, i32) {
    %c0_i32 = arith.constant 0 : i32
    %c0_i32_0 = arith.constant 0 : i32
    return %arg0, %c0_i32 : i32, i32
  }
  func.func @transform_2(%arg0: i32) -> (i32, i32) {
    %c0_i32 = arith.constant 0 : i32
    %c0_i32_0 = arith.constant 0 : i32
    return %arg0, %c0_i32 : i32, i32
  }
}

</mosaic_0001>

<llo_original>
// kernel: tpu_custom_call.1
$region0: #{tpu_custom_call.1}
  #allocation0 [shape = 'u32[]', space=smem, size = 0x4, offset = 0x4, fixed_abs, tag = 'smem constant byte address 0x4 - core index']
  #allocation1 [shape = 'u32[144,128]{1,0:T(1,128)}', space=vmem, size = 0x12000, scoped, tag = 'internal scratch']
  %s0 = inlined_call_operand.hbm [shape: f32[128,128], index: 0, kind: input, shape index: {}]
  %s1 = inlined_call_operand.hbm [shape: f32[4,128], index: 1, kind: input, shape index: {}]
  %s2 = inlined_call_operand.hbm [shape: f32[4,128], index: 2, kind: output, shape index: {}]
  %s3 = sld [smem:[#allocation0]]
  $region26: #{tpu_custom_call.1} parent=0
    _
  %s5 = ssub.s32 1, %s3
  %s6 = scalar_select 0, %s5, %s3
  $region1: #{tpu_custom_call.1} parent=0
    #allocation2 [shape = 'u8[65536]{0}', space=vmem, size = 0x10000, scoped, tag = 'input window, operand 0, single buffered']
    #allocation3 [shape = 's32[1]{0}', space=sflag, size = 0x4, scoped, tag = 'scoped memory for tpu_custom_call.1']
    #allocation4 [shape = 's32[1]{0}', space=sflag, size = 0x4, scoped, tag = 'scoped memory for tpu_custom_call.1']
    #allocation5 [shape = 'u8[2048]{0}', space=vmem, size = 0x800, scoped, tag = 'input window, operand 1, single buffered']
    #allocation6 [shape = 's32[1]{0}', space=sflag, size = 0x4, scoped, tag = 'scoped memory for tpu_custom_call.1']
    #allocation7 [shape = 'u8[2048]{0}', space=vmem, size = 0x800, scoped, tag = 'output window, operand 0, single buffered']
    %7 = vsyncpa [#allocation3], 0
    %8 = vsyncpa [#allocation6], 0
    %9 = vsyncpa [#allocation4], 0
    // Predicated region
    $region2: #{tpu_custom_call.1} parent=1 // pred_check
      _
    $region3: #{tpu_custom_call.1} parent=1 // pred_check_branch
      %11 = sbr.rel (0) target = $region5
    $region4: #{tpu_custom_call.1} parent=1 // pred_region
      %s13 = ssub.s32 2048, 2048
      %14 = vsyncadd [#allocation3], %s13
      %s15 = sshll.u32 [#allocation2], 4
      %s16 = int_to_ptr.vmem [resolvable:$true] %s15
      %21 = dma.hbm_to_vmem [thread:$0]  %s0, 2048, %s16, [#allocation3], 128, 128, 8
    $region5: #{tpu_custom_call.1} parent=1 // pred_fallthru
      _
    // Predicated region
    $region6: #{tpu_custom_call.1} parent=1 // pred_check
      _
    $region7: #{tpu_custom_call.1} parent=1 // pred_check_branch
      %23 = sbr.rel (0) target = $region9
    $region8: #{tpu_custom_call.1} parent=1 // pred_region
      %s25 = ssub.s32 64, 64
      %26 = vsyncadd [#allocation6], %s25
      %s28 = sshll.u32 [#allocation5], 4
      %s29 = int_to_ptr.vmem [resolvable:$true] %s28
      %31 = dma.hbm_to_vmem [thread:$0]  %s1, 64, %s29, [#allocation6]
    $region9: #{tpu_custom_call.1} parent=1 // pred_fallthru
      _
    // Predicated region
    $region10: #{tpu_custom_call.1} parent=1 // pred_check
      _
    $region11: #{tpu_custom_call.1} parent=1 // pred_check_branch
      %33 = sbr.rel (0) target = $region13
    $region12: #{tpu_custom_call.1} parent=1 // pred_region
      %34 = dma.done [#allocation3], 2048
    $region13: #{tpu_custom_call.1} parent=1 // pred_fallthru
      _
    // Predicated region
    $region14: #{tpu_custom_call.1} parent=1 // pred_check
      _
    $region15: #{tpu_custom_call.1} parent=1 // pred_check_branch
      %36 = sbr.rel (0) target = $region17
    $region16: #{tpu_custom_call.1} parent=1 // pred_region
      %37 = dma.done [#allocation6], 64
    $region17: #{tpu_custom_call.1} parent=1 // pred_fallthru
      _
    %v38 = vld [vmem:[#allocation5] sm:$0xf]
    %v39 = vmul.f32 %v38, %v38
    %v40 = vld [vmem:[#allocation2] sm:$0xff]
    %v41 = vld [vmem:[#allocation2 + $0x8] sm:$0xff]
    %v42 = vld [vmem:[#allocation2 + $0x10] sm:$0xff]
    %v43 = vld [vmem:[#allocation2 + $0x18] sm:$0xff]
    %v44 = vld [vmem:[#allocation2 + $0x20] sm:$0xff]
    %v45 = vld [vmem:[#allocation2 + $0x28] sm:$0xff]
    %v46 = vld [vmem:[#allocation2 + $0x30] sm:$0xff]
    %v47 = vld [vmem:[#allocation2 + $0x38] sm:$0xff]
    %v48 = vld [vmem:[#allocation2 + $0x40] sm:$0xff]
    %v49 = vld [vmem:[#allocation2 + $0x48] sm:$0xff]
    %v50 = vld [vmem:[#allocation2 + $0x50] sm:$0xff]
    %v51 = vld [vmem:[#allocation2 + $0x58] sm:$0xff]
    %v52 = vld [vmem:[#allocation2 + $0x60] sm:$0xff]
    %v53 = vld [vmem:[#allocation2 + $0x68] sm:$0xff]
    %v54 = vld [vmem:[#allocation2 + $0x70] sm:$0xff]
    %v55 = vld [vmem:[#allocation2 + $0x78] sm:$0xff]
    %56 = vmatprep.subr.mxu0 0.0
    %v57 = vand.u32 %v40, 4294901760
    %58 = vmatpush1.msra.mxu0 %v57
    %59 = vmatprep.subr.mxu0 0.0
    %v60 = vand.u32 %v41, 4294901760
    %61 = vmatpush1.msra.mxu0 %v60
    %62 = vmatprep.subr.mxu0 0.0
    %v63 = vand.u32 %v42, 4294901760
    %64 = vmatpush1.msra.mxu0 %v63
    %65 = vmatprep.subr.mxu0 0.0
    %v66 = vand.u32 %v43, 4294901760
    %67 = vmatpush1.msra.mxu0 %v66
    %68 = vmatprep.subr.mxu0 0.0
    %v69 = vand.u32 %v44, 4294901760
    %70 = vmatpush1.msra.mxu0 %v69
    %71 = vmatprep.subr.mxu0 0.0
    %v72 = vand.u32 %v45, 4294901760
    %73 = vmatpush1.msra.mxu0 %v72
    %74 = vmatprep.subr.mxu0 0.0
    %v75 = vand.u32 %v46, 4294901760
    %76 = vmatpush1.msra.mxu0 %v75
    %77 = vmatprep.subr.mxu0 0.0
    %v78 = vand.u32 %v47, 4294901760
    %79 = vmatpush1.msra.mxu0 %v78
    %80 = vmatprep.subr.mxu0 0.0
    %v81 = vand.u32 %v48, 4294901760
    %82 = vmatpush1.msra.mxu0 %v81
    %83 = vmatprep.subr.mxu0 0.0
    %v84 = vand.u32 %v49, 4294901760
    %85 = vmatpush1.msra.mxu0 %v84
    %86 = vmatprep.subr.mxu0 0.0
    %v87 = vand.u32 %v50, 4294901760
    %88 = vmatpush1.msra.mxu0 %v87
    %89 = vmatprep.subr.mxu0 0.0
    %v90 = vand.u32 %v51, 4294901760
    %91 = vmatpush1.msra.mxu0 %v90
    %92 = vmatprep.subr.mxu0 0.0
    %v93 = vand.u32 %v52, 4294901760
    %94 = vmatpush1.msra.mxu0 %v93
    %95 = vmatprep.subr.mxu0 0.0
    %v96 = vand.u32 %v53, 4294901760
    %97 = vmatpush1.msra.mxu0 %v96
    %98 = vmatprep.subr.mxu0 0.0
    %v99 = vand.u32 %v54, 4294901760
    %100 = vmatpush1.msra.mxu0 %v99
    %101 = vmatprep.subr.mxu0 0.0
    %v102 = vand.u32 %v55, 4294901760
    %103 = vmatpush1.msra.mxu0 %v102
    %104 = vmatprep.subr.mxu0 0.0
    %105 = vmatpush1.msra.mxu0 0.0
    %106 = vmatprep.subr.mxu0 0.0
    %107 = vmatpush1.msra.mxu0 0.0
    %108 = vmatprep.subr.mxu0 0.0
    %109 = vmatpush1.msra.mxu0 0.0
    %110 = vmatprep.subr.mxu0 0.0
    %111 = vmatpush1.msra.mxu0 0.0
    %112 = vmatprep.subr.mxu0 0.0
    %113 = vmatpush1.msra.mxu0 0.0
    %114 = vmatprep.subr.mxu0 0.0
    %115 = vmatpush1.msra.mxu0 0.0
    %116 = vmatprep.subr.mxu0 0.0
    %117 = vmatpush1.msra.mxu0 0.0
    %118 = vmatprep.subr.mxu0 0.0
    %119 = vmatpush1.msra.mxu0 0.0
    %120 = vmatprep.subr.mxu0 0.0
    %121 = vmatpush1.msra.mxu0 0.0
    %122 = vmatprep.subr.mxu0 0.0
    %123 = vmatpush1.msra.mxu0 0.0
    %124 = vmatprep.subr.mxu0 0.0
    %125 = vmatpush1.msra.mxu0 0.0
    %126 = vmatprep.subr.mxu0 0.0
    %127 = vmatpush1.msra.mxu0 0.0
    %128 = vmatprep.subr.mxu0 0.0
    %129 = vmatpush1.msra.mxu0 0.0
    %130 = vmatprep.subr.mxu0 0.0
    %131 = vmatpush1.msra.mxu0 0.0
    %132 = vmatprep.subr.mxu0 0.0
    %133 = vmatpush1.msra.mxu0 0.0
    %134 = vmatprep.subr.mxu0 0.0
    %135 = vmatpush1.msra.mxu0 0.0
    %136 = vmatprep.mubr.f32.mxu0 0.0
    %v137 = vand.u32 %v39, 4294901760
    %v138 = vsub.f32 %v39, %v137
    %v139 = vand.u32 %v138, 4294901760
    %v140 = vsub.f32 %v138, %v139
    %v141 = vand.u32 %v140, 4294901760
    %142 = vmatmul.mubr.f32.gmra.mrb[0].mxu0 %v141
    %v143 = vpop.f32.mrb[0].mxu0
    %v144 = vadd.f32 0.0, %v143
    %v145 = vpop.f32.mrb[0].mxu0
    %146 = vdwg.mxu0
    %147 = vmatprep.subr.mxu0 0.0
    %v148 = vand.u32 %v40, 4294901760
    %v149 = vsub.f32 %v40, %v148
    %v150 = vand.u32 %v149, 4294901760
    %v151 = vsub.f32 %v149, %v150
    %v152 = vand.u32 %v151, 4294901760
    %153 = vmatpush1.msra.mxu0 %v152
    %154 = vmatprep.subr.mxu0 0.0
    %v155 = vand.u32 %v41, 4294901760
    %v156 = vsub.f32 %v41, %v155
    %v157 = vand.u32 %v156, 4294901760
    %v158 = vsub.f32 %v156, %v157
    %v159 = vand.u32 %v158, 4294901760
    %160 = vmatpush1.msra.mxu0 %v159
    %161 = vmatprep.subr.mxu0 0.0
    %v162 = vand.u32 %v42, 4294901760
    %v163 = vsub.f32 %v42, %v162
    %v164 = vand.u32 %v163, 4294901760
    %v165 = vsub.f32 %v163, %v164
    %v166 = vand.u32 %v165, 4294901760
    %167 = vmatpush1.msra.mxu0 %v166
    %168 = vmatprep.subr.mxu0 0.0
    %v169 = vand.u32 %v43, 4294901760
    %v170 = vsub.f32 %v43, %v169
    %v171 = vand.u32 %v170, 4294901760
    %v172 = vsub.f32 %v170, %v171
    %v173 = vand.u32 %v172, 4294901760
    %174 = vmatpush1.msra.mxu0 %v173
    %175 = vmatprep.subr.mxu0 0.0
    %v176 = vand.u32 %v44, 4294901760
    %v177 = vsub.f32 %v44, %v176
    %v178 = vand.u32 %v177, 4294901760
    %v179 = vsub.f32 %v177, %v178
    %v180 = vand.u32 %v179, 4294901760
    %181 = vmatpush1.msra.mxu0 %v180
    %182 = vmatprep.subr.mxu0 0.0
    %v183 = vand.u32 %v45, 4294901760
    %v184 = vsub.f32 %v45, %v183
    %v185 = vand.u32 %v184, 4294901760
    %v186 = vsub.f32 %v184, %v185
    %v187 = vand.u32 %v186, 4294901760
    %188 = vmatpush1.msra.mxu0 %v187
    %189 = vmatprep.subr.mxu0 0.0
    %v190 = vand.u32 %v46, 4294901760
    %v191 = vsub.f32 %v46, %v190
    %v192 = vand.u32 %v191, 4294901760
    %v193 = vsub.f32 %v191, %v192
    %v194 = vand.u32 %v193, 4294901760
    %195 = vmatpush1.msra.mxu0 %v194
    %196 = vmatprep.subr.mxu0 0.0
    %v197 = vand.u32 %v47, 4294901760
    %v198 = vsub.f32 %v47, %v197
    %v199 = vand.u32 %v198, 4294901760
    %v200 = vsub.f32 %v198, %v199
    %v201 = vand.u32 %v200, 4294901760
    %202 = vmatpush1.msra.mxu0 %v201
    %203 = vmatprep.subr.mxu0 0.0
    %v204 = vand.u32 %v48, 4294901760
    %v205 = vsub.f32 %v48, %v204
    %v206 = vand.u32 %v205, 4294901760
    %v207 = vsub.f32 %v205, %v206
    %v208 = vand.u32 %v207, 4294901760
    %209 = vmatpush1.msra.mxu0 %v208
    %210 = vmatprep.subr.mxu0 0.0
    %v211 = vand.u32 %v49, 4294901760
    %v212 = vsub.f32 %v49, %v211
    %v213 = vand.u32 %v212, 4294901760
    %v214 = vsub.f32 %v212, %v213
    %v215 = vand.u32 %v214, 4294901760
    %216 = vmatpush1.msra.mxu0 %v215
    %217 = vmatprep.subr.mxu0 0.0
    %v218 = vand.u32 %v50, 4294901760
    %v219 = vsub.f32 %v50, %v218
    %v220 = vand.u32 %v219, 4294901760
    %v221 = vsub.f32 %v219, %v220
    %v222 = vand.u32 %v221, 4294901760
    %223 = vmatpush1.msra.mxu0 %v222
    %224 = vmatprep.subr.mxu0 0.0
    %v225 = vand.u32 %v51, 4294901760
    %v226 = vsub.f32 %v51, %v225
    %v227 = vand.u32 %v226, 4294901760
    %v228 = vsub.f32 %v226, %v227
    %v229 = vand.u32 %v228, 4294901760
    %230 = vmatpush1.msra.mxu0 %v229
    %231 = vmatprep.subr.mxu0 0.0
    %v232 = vand.u32 %v52, 4294901760
    %v233 = vsub.f32 %v52, %v232
    %v234 = vand.u32 %v233, 4294901760
    %v235 = vsub.f32 %v233, %v234
    %v236 = vand.u32 %v235, 4294901760
    %237 = vmatpush1.msra.mxu0 %v236
    %238 = vmatprep.subr.mxu0 0.0
    %v239 = vand.u32 %v53, 4294901760
    %v240 = vsub.f32 %v53, %v239
    %v241 = vand.u32 %v240, 4294901760
    %v242 = vsub.f32 %v240, %v241
    %v243 = vand.u32 %v242, 4294901760
    %244 = vmatpush1.msra.mxu0 %v243
    %245 = vmatprep.subr.mxu0 0.0
    %v246 = vand.u32 %v54, 4294901760
    %v247 = vsub.f32 %v54, %v246
    %v248 = vand.u32 %v247, 4294901760
    %v249 = vsub.f32 %v247, %v248
    %v250 = vand.u32 %v249, 4294901760
    %251 = vmatpush1.msra.mxu0 %v250
    %252 = vmatprep.subr.mxu0 0.0
    %v253 = vand.u32 %v55, 4294901760
    %v254 = vsub.f32 %v55, %v253
    %v255 = vand.u32 %v254, 4294901760
    %v256 = vsub.f32 %v254, %v255
    %v257 = vand.u32 %v256, 4294901760
    %258 = vmatpush1.msra.mxu0 %v257
    %259 = vmatprep.subr.mxu0 0.0
    %260 = vmatpush1.msra.mxu0 0.0
    %261 = vmatprep.subr.mxu0 0.0
    %262 = vmatpush1.msra.mxu0 0.0
    %263 = vmatprep.subr.mxu0 0.0
    %264 = vmatpush1.msra.mxu0 0.0
    %265 = vmatprep.subr.mxu0 0.0
    %266 = vmatpush1.msra.mxu0 0.0
    %267 = vmatprep.subr.mxu0 0.0
    %268 = vmatpush1.msra.mxu0 0.0
    %269 = vmatprep.subr.mxu0 0.0
    %270 = vmatpush1.msra.mxu0 0.0
    %271 = vmatprep.subr.mxu0 0.0
    %272 = vmatpush1.msra.mxu0 0.0
    %273 = vmatprep.subr.mxu0 0.0
    %274 = vmatpush1.msra.mxu0 0.0
    %275 = vmatprep.subr.mxu0 0.0
    %276 = vmatpush1.msra.mxu0 0.0
    %277 = vmatprep.subr.mxu0 0.0
    %278 = vmatpush1.msra.mxu0 0.0
    %279 = vmatprep.subr.mxu0 0.0
    %280 = vmatpush1.msra.mxu0 0.0
    %281 = vmatprep.subr.mxu0 0.0
    %282 = vmatpush1.msra.mxu0 0.0
    %283 = vmatprep.subr.mxu0 0.0
    %284 = vmatpush1.msra.mxu0 0.0
    %285 = vmatprep.subr.mxu0 0.0
    %286 = vmatpush1.msra.mxu0 0.0
    %287 = vmatprep.subr.mxu0 0.0
    %288 = vmatpush1.msra.mxu0 0.0
    %289 = vmatprep.subr.mxu0 0.0
    %290 = vmatpush1.msra.mxu0 0.0
    %291 = vmatprep.mubr.f32.mxu0 0.0
    %v292 = vand.u32 %v39, 4294901760
    %293 = vmatmul.mubr.f32.gmra.mrb[0].mxu0 %v292
    %v294 = vpop.f32.mrb[0].mxu0
    %v295 = vadd.f32 %v144, %v294
    %v296 = vpop.f32.mrb[0].mxu0
    %297 = vdwg.mxu0
    %298 = vmatprep.subr.mxu0 0.0
    %v299 = vand.u32 %v40, 4294901760
    %v300 = vsub.f32 %v40, %v299
    %301 = vmatpush1.msra.mxu0 %v300
    %302 = vmatprep.subr.mxu0 0.0
    %v303 = vand.u32 %v41, 4294901760
    %v304 = vsub.f32 %v41, %v303
    %305 = vmatpush1.msra.mxu0 %v304
    %306 = vmatprep.subr.mxu0 0.0
    %v307 = vand.u32 %v42, 4294901760
    %v308 = vsub.f32 %v42, %v307
    %309 = vmatpush1.msra.mxu0 %v308
    %310 = vmatprep.subr.mxu0 0.0
    %v311 = vand.u32 %v43, 4294901760
    %v312 = vsub.f32 %v43, %v311
    %313 = vmatpush1.msra.mxu0 %v312
    %314 = vmatprep.subr.mxu0 0.0
    %v315 = vand.u32 %v44, 4294901760
    %v316 = vsub.f32 %v44, %v315
    %317 = vmatpush1.msra.mxu0 %v316
    %318 = vmatprep.subr.mxu0 0.0
    %v319 = vand.u32 %v45, 4294901760
    %v320 = vsub.f32 %v45, %v319
    %321 = vmatpush1.msra.mxu0 %v320
    %322 = vmatprep.subr.mxu0 0.0
    %v323 = vand.u32 %v46, 4294901760
    %v324 = vsub.f32 %v46, %v323
    %325 = vmatpush1.msra.mxu0 %v324
    %326 = vmatprep.subr.mxu0 0.0
    %v327 = vand.u32 %v47, 4294901760
    %v328 = vsub.f32 %v47, %v327
    %329 = vmatpush1.msra.mxu0 %v328
    %330 = vmatprep.subr.mxu0 0.0
    %v331 = vand.u32 %v48, 4294901760
    %v332 = vsub.f32 %v48, %v331
    %333 = vmatpush1.msra.mxu0 %v332
    %334 = vmatprep.subr.mxu0 0.0
    %v335 = vand.u32 %v49, 4294901760
    %v336 = vsub.f32 %v49, %v335
    %337 = vmatpush1.msra.mxu0 %v336
    %338 = vmatprep.subr.mxu0 0.0
    %v339 = vand.u32 %v50, 4294901760
    %v340 = vsub.f32 %v50, %v339
    %341 = vmatpush1.msra.mxu0 %v340
    %342 = vmatprep.subr.mxu0 0.0
    %v343 = vand.u32 %v51, 4294901760
    %v344 = vsub.f32 %v51, %v343
    %345 = vmatpush1.msra.mxu0 %v344
    %346 = vmatprep.subr.mxu0 0.0
    %v347 = vand.u32 %v52, 4294901760
    %v348 = vsub.f32 %v52, %v347
    %349 = vmatpush1.msra.mxu0 %v348
    %350 = vmatprep.subr.mxu0 0.0
    %v351 = vand.u32 %v53, 4294901760
    %v352 = vsub.f32 %v53, %v351
    %353 = vmatpush1.msra.mxu0 %v352
    %354 = vmatprep.subr.mxu0 0.0
    %v355 = vand.u32 %v54, 4294901760
    %v356 = vsub.f32 %v54, %v355
    %357 = vmatpush1.msra.mxu0 %v356
    %358 = vmatprep.subr.mxu0 0.0
    %v359 = vand.u32 %v55, 4294901760
    %v360 = vsub.f32 %v55, %v359
    %361 = vmatpush1.msra.mxu0 %v360
    %362 = vmatprep.subr.mxu0 0.0
    %363 = vmatpush1.msra.mxu0 0.0
    %364 = vmatprep.subr.mxu0 0.0
    %365 = vmatpush1.msra.mxu0 0.0
    %366 = vmatprep.subr.mxu0 0.0
    %367 = vmatpush1.msra.mxu0 0.0
    %368 = vmatprep.subr.mxu0 0.0
    %369 = vmatpush1.msra.mxu0 0.0
    %370 = vmatprep.subr.mxu0 0.0
    %371 = vmatpush1.msra.mxu0 0.0
    %372 = vmatprep.subr.mxu0 0.0
    %373 = vmatpush1.msra.mxu0 0.0
    %374 = vmatprep.subr.mxu0 0.0
    %375 = vmatpush1.msra.mxu0 0.0
    %376 = vmatprep.subr.mxu0 0.0
    %377 = vmatpush1.msra.mxu0 0.0
    %378 = vmatprep.subr.mxu0 0.0
    %379 = vmatpush1.msra.mxu0 0.0
    %380 = vmatprep.subr.mxu0 0.0
    %381 = vmatpush1.msra.mxu0 0.0
    %382 = vmatprep.subr.mxu0 0.0
    %383 = vmatpush1.msra.mxu0 0.0
    %384 = vmatprep.subr.mxu0 0.0
    %385 = vmatpush1.msra.mxu0 0.0
    %386 = vmatprep.subr.mxu0 0.0
    %387 = vmatpush1.msra.mxu0 0.0
    %388 = vmatprep.subr.mxu0 0.0
    %389 = vmatpush1.msra.mxu0 0.0
    %390 = vmatprep.subr.mxu0 0.0
    %391 = vmatpush1.msra.mxu0 0.0
    %392 = vmatprep.subr.mxu0 0.0
    %393 = vmatpush1.msra.mxu0 0.0
    %394 = vmatprep.mubr.f32.mxu0 0.0
    %v395 = vand.u32 %v39, 4294901760
    %v396 = vsub.f32 %v39, %v395
    %397 = vmatmul.mubr.f32.gmra.mrb[0].mxu0 %v396
    %v398 = vpop.f32.mrb[0].mxu0
    %v399 = vadd.f32 %v295, %v398
    %v400 = vpop.f32.mrb[0].mxu0
    %401 = vdwg.mxu0
    %402 = vmatprep.subr.mxu0 0.0
    %v403 = vand.u32 %v40, 4294901760
    %404 = vmatpush1.msra.mxu0 %v403
    %405 = vmatprep.subr.mxu0 0.0
    %v406 = vand.u32 %v41, 4294901760
    %407 = vmatpush1.msra.mxu0 %v406
    %408 = vmatprep.subr.mxu0 0.0
    %v409 = vand.u32 %v42, 4294901760
    %410 = vmatpush1.msra.mxu0 %v409
    %411 = vmatprep.subr.mxu0 0.0
    %v412 = vand.u32 %v43, 4294901760
    %413 = vmatpush1.msra.mxu0 %v412
    %414 = vmatprep.subr.mxu0 0.0
    %v415 = vand.u32 %v44, 4294901760
    %416 = vmatpush1.msra.mxu0 %v415
    %417 = vmatprep.subr.mxu0 0.0
    %v418 = vand.u32 %v45, 4294901760
    %419 = vmatpush1.msra.mxu0 %v418
    %420 = vmatprep.subr.mxu0 0.0
    %v421 = vand.u32 %v46, 4294901760
    %422 = vmatpush1.msra.mxu0 %v421
    %423 = vmatprep.subr.mxu0 0.0
    %v424 = vand.u32 %v47, 4294901760
    %425 = vmatpush1.msra.mxu0 %v424
    %426 = vmatprep.subr.mxu0 0.0
    %v427 = vand.u32 %v48, 4294901760
    %428 = vmatpush1.msra.mxu0 %v427
    %429 = vmatprep.subr.mxu0 0.0
    %v430 = vand.u32 %v49, 4294901760
    %431 = vmatpush1.msra.mxu0 %v430
    %432 = vmatprep.subr.mxu0 0.0
    %v433 = vand.u32 %v50, 4294901760
    %434 = vmatpush1.msra.mxu0 %v433
    %435 = vmatprep.subr.mxu0 0.0
    %v436 = vand.u32 %v51, 4294901760
    %437 = vmatpush1.msra.mxu0 %v436
    %438 = vmatprep.subr.mxu0 0.0
    %v439 = vand.u32 %v52, 4294901760
    %440 = vmatpush1.msra.mxu0 %v439
    %441 = vmatprep.subr.mxu0 0.0
    %v442 = vand.u32 %v53, 4294901760
    %443 = vmatpush1.msra.mxu0 %v442
    %444 = vmatprep.subr.mxu0 0.0
    %v445 = vand.u32 %v54, 4294901760
    %446 = vmatpush1.msra.mxu0 %v445
    %447 = vmatprep.subr.mxu0 0.0
    %v448 = vand.u32 %v55, 4294901760
    %449 = vmatpush1.msra.mxu0 %v448
    %450 = vmatprep.subr.mxu0 0.0
    %451 = vmatpush1.msra.mxu0 0.0
    %452 = vmatprep.subr.mxu0 0.0
    %453 = vmatpush1.msra.mxu0 0.0
    %454 = vmatprep.subr.mxu0 0.0
    %455 = vmatpush1.msra.mxu0 0.0
    %456 = vmatprep.subr.mxu0 0.0
    %457 = vmatpush1.msra.mxu0 0.0
    %458 = vmatprep.subr.mxu0 0.0
    %459 = vmatpush1.msra.mxu0 0.0
    %460 = vmatprep.subr.mxu0 0.0
    %461 = vmatpush1.msra.mxu0 0.0
    %462 = vmatprep.subr.mxu0 0.0
    %463 = vmatpush1.msra.mxu0 0.0
    %464 = vmatprep.subr.mxu0 0.0
    %465 = vmatpush1.msra.mxu0 0.0
    %466 = vmatprep.subr.mxu0 0.0
    %467 = vmatpush1.msra.mxu0 0.0
    %468 = vmatprep.subr.mxu0 0.0
    %469 = vmatpush1.msra.mxu0 0.0
    %470 = vmatprep.subr.mxu0 0.0
    %471 = vmatpush1.msra.mxu0 0.0
    %472 = vmatprep.subr.mxu0 0.0
    %473 = vmatpush1.msra.mxu0 0.0
    %474 = vmatprep.subr.mxu0 0.0
    %475 = vmatpush1.msra.mxu0 0.0
    %476 = vmatprep.subr.mxu0 0.0
    %477 = vmatpush1.msra.mxu0 0.0
    %478 = vmatprep.subr.mxu0 0.0
    %479 = vmatpush1.msra.mxu0 0.0
    %480 = vmatprep.subr.mxu0 0.0
    %481 = vmatpush1.msra.mxu0 0.0
    %482 = vmatprep.mubr.f32.mxu0 0.0
    %v483 = vand.u32 %v39, 4294901760
    %v484 = vsub.f32 %v39, %v483
    %v485 = vand.u32 %v484, 4294901760
    %486 = vmatmul.mubr.f32.gmra.mrb[0].mxu0 %v485
    %v487 = vpop.f32.mrb[0].mxu0
    %v488 = vadd.f32 %v399, %v487
    %v489 = vpop.f32.mrb[0].mxu0
    %490 = vdwg.mxu0
    %491 = vmatprep.subr.mxu0 0.0
    %v492 = vand.u32 %v40, 4294901760
    %v493 = vsub.f32 %v40, %v492
    %v494 = vand.u32 %v493, 4294901760
    %495 = vmatpush1.msra.mxu0 %v494
    %496 = vmatprep.subr.mxu0 0.0
    %v497 = vand.u32 %v41, 4294901760
    %v498 = vsub.f32 %v41, %v497
    %v499 = vand.u32 %v498, 4294901760
    %500 = vmatpush1.msra.mxu0 %v499
    %501 = vmatprep.subr.mxu0 0.0
    %v502 = vand.u32 %v42, 4294901760
    %v503 = vsub.f32 %v42, %v502
    %v504 = vand.u32 %v503, 4294901760
    %505 = vmatpush1.msra.mxu0 %v504
    %506 = vmatprep.subr.mxu0 0.0
    %v507 = vand.u32 %v43, 4294901760
    %v508 = vsub.f32 %v43, %v507
    %v509 = vand.u32 %v508, 4294901760
    %510 = vmatpush1.msra.mxu0 %v509
    %511 = vmatprep.subr.mxu0 0.0
    %v512 = vand.u32 %v44, 4294901760
    %v513 = vsub.f32 %v44, %v512
    %v514 = vand.u32 %v513, 4294901760
    %515 = vmatpush1.msra.mxu0 %v514
    %516 = vmatprep.subr.mxu0 0.0
    %v517 = vand.u32 %v45, 4294901760
    %v518 = vsub.f32 %v45, %v517
    %v519 = vand.u32 %v518, 4294901760
    %520 = vmatpush1.msra.mxu0 %v519
    %521 = vmatprep.subr.mxu0 0.0
    %v522 = vand.u32 %v46, 4294901760
    %v523 = vsub.f32 %v46, %v522
    %v524 = vand.u32 %v523, 4294901760
    %525 = vmatpush1.msra.mxu0 %v524
    %526 = vmatprep.subr.mxu0 0.0
    %v527 = vand.u32 %v47, 4294901760
    %v528 = vsub.f32 %v47, %v527
    %v529 = vand.u32 %v528, 4294901760
    %530 = vmatpush1.msra.mxu0 %v529
    %531 = vmatprep.subr.mxu0 0.0
    %v532 = vand.u32 %v48, 4294901760
    %v533 = vsub.f32 %v48, %v532
    %v534 = vand.u32 %v533, 4294901760
    %535 = vmatpush1.msra.mxu0 %v534
    %536 = vmatprep.subr.mxu0 0.0
    %v537 = vand.u32 %v49, 4294901760
    %v538 = vsub.f32 %v49, %v537
    %v539 = vand.u32 %v538, 4294901760
    %540 = vmatpush1.msra.mxu0 %v539
    %541 = vmatprep.subr.mxu0 0.0
    %v542 = vand.u32 %v50, 4294901760
    %v543 = vsub.f32 %v50, %v542
    %v544 = vand.u32 %v543, 4294901760
    %545 = vmatpush1.msra.mxu0 %v544
    %546 = vmatprep.subr.mxu0 0.0
    %v547 = vand.u32 %v51, 4294901760
    %v548 = vsub.f32 %v51, %v547
    %v549 = vand.u32 %v548, 4294901760
    %550 = vmatpush1.msra.mxu0 %v549
    %551 = vmatprep.subr.mxu0 0.0
    %v552 = vand.u32 %v52, 4294901760
    %v553 = vsub.f32 %v52, %v552
    %v554 = vand.u32 %v553, 4294901760
    %555 = vmatpush1.msra.mxu0 %v554
    %556 = vmatprep.subr.mxu0 0.0
    %v557 = vand.u32 %v53, 4294901760
    %v558 = vsub.f32 %v53, %v557
    %v559 = vand.u32 %v558, 4294901760
    %560 = vmatpush1.msra.mxu0 %v559
    %561 = vmatprep.subr.mxu0 0.0
    %v562 = vand.u32 %v54, 4294901760
    %v563 = vsub.f32 %v54, %v562
    %v564 = vand.u32 %v563, 4294901760
    %565 = vmatpush1.msra.mxu0 %v564
    %566 = vmatprep.subr.mxu0 0.0
    %v567 = vand.u32 %v55, 4294901760
    %v568 = vsub.f32 %v55, %v567
    %v569 = vand.u32 %v568, 4294901760
    %570 = vmatpush1.msra.mxu0 %v569
    %571 = vmatprep.subr.mxu0 0.0
    %572 = vmatpush1.msra.mxu0 0.0
    %573 = vmatprep.subr.mxu0 0.0
    %574 = vmatpush1.msra.mxu0 0.0
    %575 = vmatprep.subr.mxu0 0.0
    %576 = vmatpush1.msra.mxu0 0.0
    %577 = vmatprep.subr.mxu0 0.0
    %578 = vmatpush1.msra.mxu0 0.0
    %579 = vmatprep.subr.mxu0 0.0
    %580 = vmatpush1.msra.mxu0 0.0
    %581 = vmatprep.subr.mxu0 0.0
    %582 = vmatpush1.msra.mxu0 0.0
    %583 = vmatprep.subr.mxu0 0.0
    %584 = vmatpush1.msra.mxu0 0.0
    %585 = vmatprep.subr.mxu0 0.0
    %586 = vmatpush1.msra.mxu0 0.0
    %587 = vmatprep.subr.mxu0 0.0
    %588 = vmatpush1.msra.mxu0 0.0
    %589 = vmatprep.subr.mxu0 0.0
    %590 = vmatpush1.msra.mxu0 0.0
    %591 = vmatprep.subr.mxu0 0.0
    %592 = vmatpush1.msra.mxu0 0.0
    %593 = vmatprep.subr.mxu0 0.0
    %594 = vmatpush1.msra.mxu0 0.0
    %595 = vmatprep.subr.mxu0 0.0
    %596 = vmatpush1.msra.mxu0 0.0
    %597 = vmatprep.subr.mxu0 0.0
    %598 = vmatpush1.msra.mxu0 0.0
    %599 = vmatprep.subr.mxu0 0.0
    %600 = vmatpush1.msra.mxu0 0.0
    %601 = vmatprep.subr.mxu0 0.0
    %602 = vmatpush1.msra.mxu0 0.0
    %603 = vmatprep.mubr.f32.mxu0 0.0
    %v604 = vand.u32 %v39, 4294901760
    %605 = vmatmul.mubr.f32.gmra.mrb[0].mxu0 %v604
    %v606 = vpop.f32.mrb[0].mxu0
    %v607 = vadd.f32 %v488, %v606
    %v608 = vpop.f32.mrb[0].mxu0
    %609 = vdwg.mxu0
    %610 = vmatprep.subr.mxu0 0.0
    %v611 = vand.u32 %v40, 4294901760
    %612 = vmatpush1.msra.mxu0 %v611
    %613 = vmatprep.subr.mxu0 0.0
    %v614 = vand.u32 %v41, 4294901760
    %615 = vmatpush1.msra.mxu0 %v614
    %616 = vmatprep.subr.mxu0 0.0
    %v617 = vand.u32 %v42, 4294901760
    %618 = vmatpush1.msra.mxu0 %v617
    %619 = vmatprep.subr.mxu0 0.0
    %v620 = vand.u32 %v43, 4294901760
    %621 = vmatpush1.msra.mxu0 %v620
    %622 = vmatprep.subr.mxu0 0.0
    %v623 = vand.u32 %v44, 4294901760
    %624 = vmatpush1.msra.mxu0 %v623
    %625 = vmatprep.subr.mxu0 0.0
    %v626 = vand.u32 %v45, 4294901760
    %627 = vmatpush1.msra.mxu0 %v626
    %628 = vmatprep.subr.mxu0 0.0
    %v629 = vand.u32 %v46, 4294901760
    %630 = vmatpush1.msra.mxu0 %v629
    %631 = vmatprep.subr.mxu0 0.0
    %v632 = vand.u32 %v47, 4294901760
    %633 = vmatpush1.msra.mxu0 %v632
    %634 = vmatprep.subr.mxu0 0.0
    %v635 = vand.u32 %v48, 4294901760
    %636 = vmatpush1.msra.mxu0 %v635
    %637 = vmatprep.subr.mxu0 0.0
    %v638 = vand.u32 %v49, 4294901760
    %639 = vmatpush1.msra.mxu0 %v638
    %640 = vmatprep.subr.mxu0 0.0
    %v641 = vand.u32 %v50, 4294901760
    %642 = vmatpush1.msra.mxu0 %v641
    %643 = vmatprep.subr.mxu0 0.0
    %v644 = vand.u32 %v51, 4294901760
    %645 = vmatpush1.msra.mxu0 %v644
    %646 = vmatprep.subr.mxu0 0.0
    %v647 = vand.u32 %v52, 4294901760
    %648 = vmatpush1.msra.mxu0 %v647
    %649 = vmatprep.subr.mxu0 0.0
    %v650 = vand.u32 %v53, 4294901760
    %651 = vmatpush1.msra.mxu0 %v650
    %652 = vmatprep.subr.mxu0 0.0
    %v653 = vand.u32 %v54, 4294901760
    %654 = vmatpush1.msra.mxu0 %v653
    %655 = vmatprep.subr.mxu0 0.0
    %v656 = vand.u32 %v55, 4294901760
    %657 = vmatpush1.msra.mxu0 %v656
    %658 = vmatprep.subr.mxu0 0.0
    %659 = vmatpush1.msra.mxu0 0.0
    %660 = vmatprep.subr.mxu0 0.0
    %661 = vmatpush1.msra.mxu0 0.0
    %662 = vmatprep.subr.mxu0 0.0
    %663 = vmatpush1.msra.mxu0 0.0
    %664 = vmatprep.subr.mxu0 0.0
    %665 = vmatpush1.msra.mxu0 0.0
    %666 = vmatprep.subr.mxu0 0.0
    %667 = vmatpush1.msra.mxu0 0.0
    %668 = vmatprep.subr.mxu0 0.0
    %669 = vmatpush1.msra.mxu0 0.0
    %670 = vmatprep.subr.mxu0 0.0
    %671 = vmatpush1.msra.mxu0 0.0
    %672 = vmatprep.subr.mxu0 0.0
    %673 = vmatpush1.msra.mxu0 0.0
    %674 = vmatprep.subr.mxu0 0.0
    %675 = vmatpush1.msra.mxu0 0.0
    %676 = vmatprep.subr.mxu0 0.0
    %677 = vmatpush1.msra.mxu0 0.0
    %678 = vmatprep.subr.mxu0 0.0
    %679 = vmatpush1.msra.mxu0 0.0
    %680 = vmatprep.subr.mxu0 0.0
    %681 = vmatpush1.msra.mxu0 0.0
    %682 = vmatprep.subr.mxu0 0.0
    %683 = vmatpush1.msra.mxu0 0.0
    %684 = vmatprep.subr.mxu0 0.0
    %685 = vmatpush1.msra.mxu0 0.0
    %686 = vmatprep.subr.mxu0 0.0
    %687 = vmatpush1.msra.mxu0 0.0
    %688 = vmatprep.subr.mxu0 0.0
    %689 = vmatpush1.msra.mxu0 0.0
    %690 = vmatprep.mubr.f32.mxu0 0.0
    %v691 = vand.u32 %v39, 4294901760
    %692 = vmatmul.mubr.f32.gmra.mrb[0].mxu0 %v691
    %v693 = vpop.f32.mrb[0].mxu0
    %v694 = vadd.f32 %v607, %v693
    %v695 = vpop.f32.mrb[0].mxu0
    %696 = vdwg.mxu0
    %v697 = vmax.f32 %v694, 1e-24
    %v698 = vrsqrt.pop %v697
    %v699 = vmul.f32 %v38, %v698
    %700 = vst [vmem:[#allocation7] sm:$0xf] %v699
    // Predicated region
    $region18: #{tpu_custom_call.1} parent=1 // pred_check
      _
    $region19: #{tpu_custom_call.1} parent=1 // pred_check_branch
      %702 = sbr.rel (0) target = $region21
    $region20: #{tpu_custom_call.1} parent=1 // pred_region
      %s704 = ssub.s32 64, 64
      %705 = vsyncadd [#allocation4], %s704
      %s707 = sshll.u32 [#allocation7], 4
      %s708 = int_to_ptr.vmem [resolvable:$true] %s707
      %710 = dma.vmem_to_hbm [thread:$0]  %s708, 64, %s2, [#allocation4]
    $region21: #{tpu_custom_call.1} parent=1 // pred_fallthru
      _
    // Predicated region
    $region22: #{tpu_custom_call.1} parent=1 // pred_check
      _
    $region23: #{tpu_custom_call.1} parent=1 // pred_check_branch
      %712 = sbr.rel (0) target = $region25
    $region24: #{tpu_custom_call.1} parent=1 // pred_region
      %713 = dma.done [#allocation4], 64
    $region25: #{tpu_custom_call.1} parent=1 // pred_fallthru
      _
    %714 = vsyncpa [#allocation3], 1
    %715 = vsyncpa [#allocation6], 1
    %716 = vsyncpa [#allocation4], 1

</llo_original>
